<compile_context>
chip_gen: v7x
topology: tpu7x:2x2x1
jax: 0.10.0
libtpu: 0.0.40
codegen_flags: <defaults>
</compile_context>

<pallas_src>
import functools

import jax
import jax.numpy as jnp
from jax.experimental import pallas as pl
from jax.experimental.pallas import tpu as pltpu

MAX_TILE_ROWS = 512          # 512 x 1024 f32 = 2 MiB per buffer


def _quant_kernel(scale_ref, zp_ref, inv_scale_ref, x_ref, o_ref, *, bits: int):
    # Per-tensor scalar quantization parameters live in SMEM (shape (1,)).
    scale = scale_ref[0]
    zp = zp_ref[0]
    inv_scale = inv_scale_ref[0]
    val_min = -(2.0 ** (bits - 1))
    val_max = 2.0 ** (bits - 1) - 1.0

    # Upcast per-vreg (mandatory on v5e which has no bf16 VALU); single store.
    x = x_ref[...].astype(jnp.float32)
    quant = jnp.clip(jnp.round(x * scale + zp), val_min, val_max)
    o_ref[...] = ((quant - zp) * inv_scale).astype(o_ref.dtype)


def nonsymmetric_quantizer_s(x, lower, length, bits: int = 8):
    """Fake-quantize `x` (any shape, e.g. NCHW) with per-tensor params."""
    orig_shape = x.shape
    dtype = x.dtype
    total = x.size

    # ---- per-tensor scalars, computed once (shape (1,), f32) ----------------
    levels = 2.0 ** bits - 1.0
    length_f = jnp.abs(length.astype(jnp.float32))
    scale = levels / length_f
    zero_point = -jnp.round(lower.astype(jnp.float32) * scale) - 2.0 ** (bits - 1)
    inv_scale = length_f / levels

    # ---- lane-dense 2-D slab (rows, W), native dtype, no copies if possible -
    lane_w = None
    for w in (1024, 512, 256, 128):
        if total % w == 0:
            lane_w = w
            break

    flat = x.reshape(-1)
    padded = False
    if lane_w is None:
        # Fallback for odd element counts: minimal tail pad to a 128 multiple.
        lane_w = 128
        pad_to = pl.cdiv(total, lane_w) * lane_w
        flat = jnp.pad(flat, (0, pad_to - total))
        padded = True

    rows = flat.size // lane_w
    x2 = flat.reshape(rows, lane_w)

    # Block rows: either the full row extent (always legal) or a large multiple of 8.
    tile_r = rows if rows < MAX_TILE_ROWS else MAX_TILE_ROWS
    grid = (pl.cdiv(rows, tile_r),)

    kernel = functools.partial(_quant_kernel, bits=bits)

    out2 = pl.pallas_call(
        kernel,
        out_shape=jax.ShapeDtypeStruct((rows, lane_w), dtype),
        grid=grid,
        in_specs=[
            pl.BlockSpec(memory_space=pltpu.SMEM),          # scale      (1,)
            pl.BlockSpec(memory_space=pltpu.SMEM),          # zero_point (1,)
            pl.BlockSpec(memory_space=pltpu.SMEM),          # inv_scale  (1,)
            pl.BlockSpec((tile_r, lane_w), lambda i: (i, 0)),
        ],
        out_specs=pl.BlockSpec((tile_r, lane_w), lambda i: (i, 0)),
        compiler_params=pltpu.CompilerParams(
            dimension_semantics=("parallel",)),
    )(scale, zero_point, inv_scale, x2)

    if padded:
        out = out2.reshape(-1)[:total].reshape(orig_shape)
    else:
        out = out2.reshape(orig_shape)
    return out


def _reference(x, lower, length, bits: int = 8):
    """Pure-JAX reference matching the PyTorch forward exactly."""
    length = jnp.abs(length)
    scale = (2.0 ** bits - 1.0) / length
    zero_point = -jnp.round(lower * scale) - 2.0 ** (bits - 1)
    val_min = -(2.0 ** (bits - 1))
    val_max = 2.0 ** (bits - 1) - 1.0
    quant = jnp.clip(jnp.round(scale * x + zero_point), val_min, val_max)
    return (quant - zero_point) / scale


if __name__ == "__main__":
    key = jax.random.PRNGKey(0)
    # NCHW input, small shape consistent with a conv activation.
    x = jax.random.normal(key, (2, 4, 16, 16), dtype=jnp.float32)

    # Deterministic parameter init per the module's __init__ (shape=(1,), bits=8):
    #   lower = zeros(shape), length = ones(shape)
    lower = jnp.zeros((1,), dtype=jnp.float32)
    length = jnp.ones((1,), dtype=jnp.float32)
    bits = 8

    out = nonsymmetric_quantizer_s(x, lower, length, bits=bits)
    out = jax.block_until_ready(out)

    ref = _reference(x, lower, length, bits=bits)
    assert out.shape == x.shape and out.dtype == x.dtype
    assert jnp.allclose(out, ref, atol=1e-5, rtol=1e-5), "mismatch vs reference"

    print("KERNEL_OK")
</pallas_src>

<mosaic_0001>
module attributes {stable_mosaic.version = 11 : i64} {
  func.func @_quant_kernel(%arg0: i32, %arg1: memref<1xf32, #tpu.memory_space<smem>>, %arg2: memref<1xf32, #tpu.memory_space<smem>>, %arg3: memref<1xf32, #tpu.memory_space<smem>>, %arg4: memref<2x1024xf32, #tpu.memory_space<vmem>>, %arg5: memref<2x1024xf32, #tpu.memory_space<vmem>>) attributes {dimension_semantics = [#tpu.dimension_semantics<parallel>], iteration_bounds = array<i64: 1>, scalar_prefetch = 0 : i64, scratch_operands = 0 : i64, tpu.core_type = #tpu.core_type<tc>, window_params = [{transform_indices = @transform_0, window_bounds = array<i64: 1>}, {transform_indices = @transform_1, window_bounds = array<i64: 1>}, {transform_indices = @transform_2, window_bounds = array<i64: 1>}, {transform_indices = @transform_3, window_bounds = array<i64: 2, 1024>}, {transform_indices = @transform_4, window_bounds = array<i64: 2, 1024>}]} {
    %c0 = arith.constant 0 : index
    %0 = memref.load %arg1[%c0] : memref<1xf32, #tpu.memory_space<smem>>
    %c0_0 = arith.constant 0 : index
    %1 = memref.load %arg2[%c0_0] : memref<1xf32, #tpu.memory_space<smem>>
    %c0_1 = arith.constant 0 : index
    %2 = memref.load %arg3[%c0_1] : memref<1xf32, #tpu.memory_space<smem>>
    %c0_2 = arith.constant 0 : index
    %c0_3 = arith.constant 0 : index
    %3 = vector.load %arg4[%c0_2, %c0_3] : memref<2x1024xf32, #tpu.memory_space<vmem>>, vector<2x1024xf32>
    %4 = vector.broadcast %0 : f32 to vector<2x1024xf32>
    %5 = arith.mulf %3, %4 : vector<2x1024xf32>
    %6 = vector.broadcast %1 : f32 to vector<2x1024xf32>
    %7 = arith.addf %5, %6 : vector<2x1024xf32>
    %8 = math.roundeven %7 : vector<2x1024xf32>
    %cst = arith.constant -1.280000e+02 : f32
    %cst_4 = arith.constant 1.270000e+02 : f32
    %9 = vector.broadcast %cst : f32 to vector<2x1024xf32>
    %10 = arith.maximumf %9, %8 : vector<2x1024xf32>
    %11 = vector.broadcast %cst_4 : f32 to vector<2x1024xf32>
    %12 = arith.minimumf %11, %10 : vector<2x1024xf32>
    %13 = vector.broadcast %1 : f32 to vector<2x1024xf32>
    %14 = arith.subf %12, %13 : vector<2x1024xf32>
    %15 = vector.broadcast %2 : f32 to vector<2x1024xf32>
    %16 = arith.mulf %14, %15 : vector<2x1024xf32>
    %c0_5 = arith.constant 0 : index
    %c0_6 = arith.constant 0 : index
    %17 = vector.load %arg5[%c0_5, %c0_6] : memref<2x1024xf32, #tpu.memory_space<vmem>>, vector<2x1024xf32>
    tpu.vector_store %arg5[%c0_5, %c0_6], %16 {strides = array<i32>} : memref<2x1024xf32, #tpu.memory_space<vmem>>, vector<2x1024xf32>,
    return
  }
  func.func @transform_0(%arg0: i32) -> i32 {
    %c0_i32 = arith.constant 0 : i32
    %c0_i32_0 = arith.constant 0 : i32
    return %c0_i32 : i32
  }
  func.func @transform_1(%arg0: i32) -> i32 {
    %c0_i32 = arith.constant 0 : i32
    %c0_i32_0 = arith.constant 0 : i32
    return %c0_i32 : i32
  }
  func.func @transform_2(%arg0: i32) -> i32 {
    %c0_i32 = arith.constant 0 : i32
    %c0_i32_0 = arith.constant 0 : i32
    return %c0_i32 : i32
  }
  func.func @transform_3(%arg0: i32) -> (i32, i32) {
    %c0_i32 = arith.constant 0 : i32
    %c0_i32_0 = arith.constant 0 : i32
    return %arg0, %c0_i32 : i32, i32
  }
  func.func @transform_4(%arg0: i32) -> (i32, i32) {
    %c0_i32 = arith.constant 0 : i32
    %c0_i32_0 = arith.constant 0 : i32
    return %arg0, %c0_i32 : i32, i32
  }
}

</mosaic_0001>

<llo_original>
// kernel: tpu_custom_call.1
$region0: #{tpu_custom_call.1}
  #allocation0 [shape = 'u32[]', space=smem, size = 0x4, offset = 0x4, fixed_abs, tag = 'smem constant byte address 0x4 - core index']
  #allocation1 [shape = 'u32[144,128]{1,0:T(1,128)}', space=vmem, size = 0x12000, scoped, tag = 'internal scratch']
  #allocation2 [shape = 'f32[1]{0:T(128)S(6)}', space=smem, size = 0x200, scoped, tag = 'scoped memory for tpu_custom_call.1']
  #allocation3 [shape = 'f32[1]{0:T(128)S(6)}', space=smem, size = 0x200, scoped, tag = 'scoped memory for tpu_custom_call.1']
  #allocation4 [shape = 'f32[1]{0:T(128)S(6)}', space=smem, size = 0x200, scoped, tag = 'scoped memory for tpu_custom_call.1']
  %s0 = inlined_call_operand.<no memory space> [shape: f32[1], index: 0, kind: input, shape index: {}]
  %s1 = inlined_call_operand.<no memory space> [shape: f32[1], index: 1, kind: input, shape index: {}]
  %s2 = inlined_call_operand.<no memory space> [shape: f32[1], index: 2, kind: input, shape index: {}]
  %s3 = inlined_call_operand.hbm [shape: f32[2,1024], index: 3, kind: input, shape index: {}]
  %s4 = inlined_call_operand.hbm [shape: f32[2,1024], index: 4, kind: output, shape index: {}]
  %s5 = sld [smem:[#allocation0]]
  $region30: #{tpu_custom_call.1} parent=0
    _
  %s7 = ssub.s32 1, %s5
  %s8 = scalar_select 0, %s7, %s5
  %9 = sst [smem:[#allocation2]] %s0
  %10 = sst [smem:[#allocation3]] %s1
  %11 = sst [smem:[#allocation4]] %s2
  $region1: #{tpu_custom_call.1} parent=0
    #allocation5 [shape = 'u8[8192]{0}', space=vmem, size = 0x2000, scoped, tag = 'input window, operand 3, single buffered']
    #allocation6 [shape = 's32[1]{0}', space=sflag, size = 0x4, scoped, tag = 'scoped memory for tpu_custom_call.1']
    #allocation7 [shape = 's32[1]{0}', space=sflag, size = 0x4, scoped, tag = 'scoped memory for tpu_custom_call.1']
    #allocation8 [shape = 'u8[8192]{0}', space=vmem, size = 0x2000, scoped, tag = 'output window, operand 0, single buffered']
    %12 = vsyncpa [#allocation6], 0
    %13 = vsyncpa [#allocation7], 0
    // Predicated region
    $region2: #{tpu_custom_call.1} parent=1 // pred_check
      _
    $region3: #{tpu_custom_call.1} parent=1 // pred_check_branch
      %15 = sbr.rel (0) target = $region5
    $region4: #{tpu_custom_call.1} parent=1 // pred_region
      _
    $region5: #{tpu_custom_call.1} parent=1 // pred_fallthru
      _
    // Predicated region
    $region6: #{tpu_custom_call.1} parent=1 // pred_check
      _
    $region7: #{tpu_custom_call.1} parent=1 // pred_check_branch
      %17 = sbr.rel (0) target = $region9
    $region8: #{tpu_custom_call.1} parent=1 // pred_region
      _
    $region9: #{tpu_custom_call.1} parent=1 // pred_fallthru
      _
    // Predicated region
    $region10: #{tpu_custom_call.1} parent=1 // pred_check
      _
    $region11: #{tpu_custom_call.1} parent=1 // pred_check_branch
      %19 = sbr.rel (0) target = $region13
    $region12: #{tpu_custom_call.1} parent=1 // pred_region
      _
    $region13: #{tpu_custom_call.1} parent=1 // pred_fallthru
      _
    // Predicated region
    $region14: #{tpu_custom_call.1} parent=1 // pred_check
      _
    $region15: #{tpu_custom_call.1} parent=1 // pred_check_branch
      %21 = sbr.rel (0) target = $region17
    $region16: #{tpu_custom_call.1} parent=1 // pred_region
      %s23 = ssub.s32 256, 256
      %24 = vsyncadd [#allocation6], %s23
      %s26 = sshll.u32 [#allocation5], 4
      %s27 = int_to_ptr.vmem [resolvable:$true] %s26
      %29 = dma.hbm_to_vmem [thread:$0]  %s3, 256, %s27, [#allocation6]
    $region17: #{tpu_custom_call.1} parent=1 // pred_fallthru
      _
    // Predicated region
    $region18: #{tpu_custom_call.1} parent=1 // pred_check
      _
    $region19: #{tpu_custom_call.1} parent=1 // pred_check_branch
      %31 = sbr.rel (0) target = $region21
    $region20: #{tpu_custom_call.1} parent=1 // pred_region
      %32 = dma.done [#allocation6], 256
    $region21: #{tpu_custom_call.1} parent=1 // pred_fallthru
      _
    %s33 = sld [smem:[#allocation2]]
    %s34 = sld [smem:[#allocation3]]
    %s35 = sld [smem:[#allocation4]]
    %v36 = vld [vmem:[#allocation5] sm:$0xff]
    %v37 = vld [vmem:[#allocation5 + $0x8] sm:$0xff]
    %v38 = vstv %s33
    %v39 = vmul.f32 %v36, %v38
    %v40 = vmul.f32 %v37, %v38
    %v41 = vstv %s34
    %v42 = vadd.f32 %v39, %v41
    %v43 = vadd.f32 %v40, %v41
    %v44 = vround.ne.pseudo %v42
    %v45 = vround.ne.pseudo %v43
    %v46 = vmax.f32 %v44, -128.0
    %v47 = vmax.f32 %v45, -128.0
    %v48 = vmin.f32 %v46, 127.0
    %v49 = vmin.f32 %v47, 127.0
    %v50 = vsub.f32 %v48, %v41
    %v51 = vsub.f32 %v49, %v41
    %v52 = vstv %s35
    %v53 = vmul.f32 %v50, %v52
    %v54 = vmul.f32 %v51, %v52
    %55 = vst [vmem:[#allocation8] sm:$0xff] %v53
    %56 = vst [vmem:[#allocation8 + $0x8] sm:$0xff] %v54
    // Predicated region
    $region22: #{tpu_custom_call.1} parent=1 // pred_check
      _
    $region23: #{tpu_custom_call.1} parent=1 // pred_check_branch
      %58 = sbr.rel (0) target = $region25
    $region24: #{tpu_custom_call.1} parent=1 // pred_region
      %s60 = ssub.s32 256, 256
      %61 = vsyncadd [#allocation7], %s60
      %s63 = sshll.u32 [#allocation8], 4
      %s64 = int_to_ptr.vmem [resolvable:$true] %s63
      %66 = dma.vmem_to_hbm [thread:$0]  %s64, 256, %s4, [#allocation7]
    $region25: #{tpu_custom_call.1} parent=1 // pred_fallthru
      _
    // Predicated region
    $region26: #{tpu_custom_call.1} parent=1 // pred_check
      _
    $region27: #{tpu_custom_call.1} parent=1 // pred_check_branch
      %68 = sbr.rel (0) target = $region29
    $region28: #{tpu_custom_call.1} parent=1 // pred_region
      %69 = dma.done [#allocation7], 256
    $region29: #{tpu_custom_call.1} parent=1 // pred_fallthru
      _
    %70 = vsyncpa [#allocation6], 1
    %71 = vsyncpa [#allocation7], 1

</llo_original>
